<compile_context>
chip_gen: v6e
topology: v6e:2x2x1
jax: 0.10.0
libtpu: 0.0.40
codegen_flags: <defaults>
</compile_context>

<pallas_src>
import jax
import jax.numpy as jnp
import numpy as np
from jax import lax
from jax.experimental import pallas as pl
from jax.experimental.pallas import tpu as pltpu

# Small, module-consistent config (in_channels=C, kernel_size=3, stride=1, pad=1)
N, C, H, W = 2, 4, 16, 16
K = 3
PAD = 1
EPS = 1e-5

WC = W * C                     # lane width of the activation slab (64)
HP, WP = H + 2 * PAD, W + 2 * PAD

assert W & (W - 1) == 0, "roll all-reduce assumes W is a power of two"

# Row layout of the packed parameter slab (all rows lane-tiled to width WC).
_ROW_DW_W = 0                  # 9 rows : depthwise 3x3 taps (t = kh*3 + kw)
_ROW_DW_B = 9                  # 1 row  : depthwise bias
_ROW_G1 = 10                   # 1 row  : BN1 gamma
_ROW_B1 = 11                   # 1 row  : BN1 beta
_ROW_PW_W = 12                 # 2C-1=7 : pointwise shifted-diagonal weights
_ROW_PW_B = 19                 # 1 row  : pointwise bias
_ROW_G2 = 20                   # 1 row  : BN2 gamma
_ROW_B2 = 21                   # 1 row  : BN2 beta
_NROWS = 22


def _bn_scale_shift(t, gamma, beta):
    """Training-mode per-channel BN, computed entirely in the lane-dense layout.

    t: (N, H, WC) activation; gamma/beta: (1, WC) lane-tiled parameters.
    Returns (scale, shift), each (1, 1, WC), such that bn(t) == t*scale + shift.
    """
    cnt = float(N * H * W)
    s = jnp.sum(t, axis=1, keepdims=True)            # (N, 1, WC)  sum
    s2 = jnp.sum(t * t, axis=1, keepdims=True)       # (N, 1, WC)  sum of squares
    st = jnp.concatenate([s, s2], axis=1)            # (N, 2, WC)
    tot = st[0:1]
    for n in range(1, N):                            # fold batch dim (N is tiny)
        tot = tot + st[n:n + 1]                      # (1, 2, WC)
    # Circular doubling all-reduce across the W lane-groups of C lanes each:
    # shifts are multiples of C so channels never mix; after log2(W) steps every
    # lane holds its channel's total, already broadcast in lane layout.  The
    # rolls ride the XLU slot, so this costs ~log2(W) VPU adds.
    step = W // 2
    while step >= 1:
        tot = tot + jnp.roll(tot, step * C, axis=-1)
        step //= 2
    mean = tot[:, 0:1, :] * (1.0 / cnt)              # (1, 1, WC)
    esq = tot[:, 1:2, :] * (1.0 / cnt)
    var = esq - mean * mean                          # biased variance (PyTorch BN)
    inv = lax.rsqrt(var + EPS)                       # EUP slot (free-ish)
    scale = inv * gamma                              # (1, 1, WC)
    shift = beta - mean * scale
    return scale, shift


def depthwise_sep_kernel(xp_ref, p_ref, o_ref):
    # xp_ref: (N, HP, WP*C) padded input slab, lane j = w*C + c
    # p_ref : (22, WC) packed, lane-tiled parameters
    # o_ref : (N, H, WC) output slab
    xp = xp_ref[...]

    # ---- depthwise 3x3, stride 1, pad 1: kh = sublane shift, kw = lane shift ----
    bdw = p_ref[_ROW_DW_B:_ROW_DW_B + 1, :]                       # (1, WC)
    acc = None
    for kh in range(K):
        for kw in range(K):
            t = kh * K + kw
            w_row = p_ref[_ROW_DW_W + t:_ROW_DW_W + t + 1, :]     # (1, WC)
            win = xp[:, kh:kh + H, kw * C:kw * C + WC]            # (N, H, WC)
            term = win * w_row
            acc = term + bdw if acc is None else acc + term       # bias in 1st tap

    # ---- BatchNorm1 (batch stats) + ReLU ----
    sc1, sh1 = _bn_scale_shift(acc,
                               p_ref[_ROW_G1:_ROW_G1 + 1, :],
                               p_ref[_ROW_B1:_ROW_B1 + 1, :])
    y = jnp.maximum(acc * sc1 + sh1, 0.0)

    # ---- pointwise 1x1 conv as 2C-1 shifted VPU multiply-adds (no MXU) ----
    pwb = p_ref[_ROW_PW_B:_ROW_PW_B + 1, :]
    z = y * p_ref[_ROW_PW_W + (C - 1):_ROW_PW_W + C, :] + pwb     # delta = 0 term
    for d in range(-(C - 1), C):
        if d == 0:
            continue
        w_row = p_ref[_ROW_PW_W + d + (C - 1):_ROW_PW_W + d + C, :]
        # roll(y, -d)[..., j] == y[..., j + d]; out-of-group lanes are zeroed
        # by the precomputed diagonal weight row, so the wrap-around is harmless.
        z = z + jnp.roll(y, -d, axis=-1) * w_row

    # ---- BatchNorm2 (batch stats) + ReLU ----
    sc2, sh2 = _bn_scale_shift(z,
                               p_ref[_ROW_G2:_ROW_G2 + 1, :],
                               p_ref[_ROW_B2:_ROW_B2 + 1, :])
    o_ref[...] = jnp.maximum(z * sc2 + sh2, 0.0)


def _pack_params(params):
    """Pack all parameters into one lane-tiled (22, WC) slab (single DMA)."""
    w_dw, b_dw, g1, bt1, w_pw, b_pw, g2, bt2 = params

    def tile_c(v):                     # (C,) -> (WC,), lane j = w*C + c -> v[c]
        return jnp.tile(v, W)

    rows = []
    for kh in range(K):                # depthwise taps
        for kw in range(K):
            rows.append(tile_c(w_dw[:, 0, kh, kw]))
    rows.append(tile_c(b_dw))
    rows.append(tile_c(g1))
    rows.append(tile_c(bt1))
    kmat = w_pw[:, :, 0, 0]            # (C_out, C_in)
    co = jnp.arange(C)
    for d in range(-(C - 1), C):       # shifted diagonals of the 1x1 weight
        ci = co + d
        valid = (ci >= 0) & (ci < C)
        diag = jnp.where(valid, kmat[co, jnp.clip(ci, 0, C - 1)], 0.0)
        rows.append(tile_c(diag))
    rows.append(tile_c(b_pw))
    rows.append(tile_c(g2))
    rows.append(tile_c(bt2))
    return jnp.stack(rows, axis=0)     # (22, WC)


def depthwise_conv_forward(x_nchw, params):
    """Wrapper: lane-dense re-layout + single Pallas call + un-layout."""
    # NCHW -> padded lane-dense slab (N, HP, WP*C); XLA fuses transpose+pad+reshape.
    x = jnp.transpose(x_nchw, (0, 2, 3, 1))                       # NHWC
    xp = jnp.pad(x, ((0, 0), (PAD, PAD), (PAD, PAD), (0, 0)))
    xp = xp.reshape(N, HP, WP * C)

    pslab = _pack_params(params)

    vmem = pl.BlockSpec(memory_space=pltpu.MemorySpace.VMEM)
    out_slab = pl.pallas_call(
        depthwise_sep_kernel,
        out_shape=jax.ShapeDtypeStruct((N, H, WC), jnp.float32),
        in_specs=[vmem, vmem],
        out_specs=vmem,
    )(xp, pslab)

    return jnp.transpose(out_slab.reshape(N, H, W, C), (0, 3, 1, 2))   # NCHW


def reference_forward(x, params):
    """Pure-JAX reference with identical (PyTorch training-mode) semantics."""
    w_dw, b_dw, g1, bt1, w_pw, b_pw, g2, bt2 = params

    def bn_relu(t, g, b):
        m = jnp.mean(t, axis=(0, 2, 3), keepdims=True)
        v = jnp.mean(jnp.square(t - m), axis=(0, 2, 3), keepdims=True)
        t = (t - m) / jnp.sqrt(v + EPS)
        t = t * g[None, :, None, None] + b[None, :, None, None]
        return jnp.maximum(t, 0.0)

    y = lax.conv_general_dilated(
        x, w_dw, (1, 1), ((PAD, PAD), (PAD, PAD)),
        dimension_numbers=('NCHW', 'OIHW', 'NCHW'), feature_group_count=C)
    y = y + b_dw[None, :, None, None]
    y = bn_relu(y, g1, bt1)

    z = lax.conv_general_dilated(
        y, w_pw, (1, 1), ((0, 0), (0, 0)),
        dimension_numbers=('NCHW', 'OIHW', 'NCHW'))
    z = z + b_pw[None, :, None, None]
    z = bn_relu(z, g2, bt2)
    return z


if __name__ == "__main__":
    key = jax.random.PRNGKey(0)
    kx, k1, k2, k3, k4 = jax.random.split(key, 5)

    x = jax.random.normal(kx, (N, C, H, W), jnp.float32)

    # Deterministic parameter init (shapes match the PyTorch module's __init__)
    w_dw = 0.1 * jax.random.normal(k1, (C, 1, K, K), jnp.float32)   # depthwise
    b_dw = 0.1 * jax.random.normal(k2, (C,), jnp.float32)
    g1 = jnp.ones((C,), jnp.float32)                                # BN defaults
    bt1 = jnp.zeros((C,), jnp.float32)
    w_pw = 0.1 * jax.random.normal(k3, (C, C, 1, 1), jnp.float32)   # pointwise
    b_pw = 0.1 * jax.random.normal(k4, (C,), jnp.float32)
    g2 = jnp.ones((C,), jnp.float32)
    bt2 = jnp.zeros((C,), jnp.float32)

    params = (w_dw, b_dw, g1, bt1, w_pw, b_pw, g2, bt2)

    out = depthwise_conv_forward(x, params)
    out = jax.block_until_ready(out)

    ref = jax.block_until_ready(reference_forward(x, params))
    np.testing.assert_allclose(np.asarray(out), np.asarray(ref),
                               rtol=1e-4, atol=1e-4)
    print("KERNEL_OK")
</pallas_src>

<mosaic_0001>
module attributes {stable_mosaic.version = 11 : i64} {
  func.func @depthwise_sep_kernel(%arg0: memref<2x18x72xf32, #tpu.memory_space<vmem>>, %arg1: memref<22x64xf32, #tpu.memory_space<vmem>>, %arg2: memref<2x16x64xf32, #tpu.memory_space<vmem>>) attributes {dimension_semantics = [], scalar_prefetch = 0 : i64, scratch_operands = 0 : i64, tpu.core_type = #tpu.core_type<tc>} {
    %c0 = arith.constant 0 : index
    %c0_0 = arith.constant 0 : index
    %c0_1 = arith.constant 0 : index
    %0 = vector.load %arg0[%c0, %c0_0, %c0_1] : memref<2x18x72xf32, #tpu.memory_space<vmem>>, vector<2x18x72xf32>
    %c9 = arith.constant 9 : index
    %c0_2 = arith.constant 0 : index
    %1 = vector.load %arg1[%c9, %c0_2] : memref<22x64xf32, #tpu.memory_space<vmem>>, vector<1x64xf32>
    %c0_3 = arith.constant 0 : index
    %c0_4 = arith.constant 0 : index
    %2 = vector.load %arg1[%c0_3, %c0_4] : memref<22x64xf32, #tpu.memory_space<vmem>>, vector<1x64xf32>
    %3 = vector.extract_strided_slice %0 {offsets = [0, 0, 0], sizes = [2, 16, 64], strides = [1, 1, 1]} : vector<2x18x72xf32> to vector<2x16x64xf32>
    %4 = vector.shape_cast %2 : vector<1x64xf32> to vector<1x1x64xf32>
    %5 = vector.broadcast %4 : vector<1x1x64xf32> to vector<2x16x64xf32>
    %6 = arith.mulf %3, %5 : vector<2x16x64xf32>
    %7 = vector.shape_cast %1 : vector<1x64xf32> to vector<1x1x64xf32>
    %8 = vector.broadcast %7 : vector<1x1x64xf32> to vector<2x16x64xf32>
    %9 = arith.addf %6, %8 : vector<2x16x64xf32>
    %c1 = arith.constant 1 : index
    %c0_5 = arith.constant 0 : index
    %10 = vector.load %arg1[%c1, %c0_5] : memref<22x64xf32, #tpu.memory_space<vmem>>, vector<1x64xf32>
    %11 = vector.extract_strided_slice %0 {offsets = [0, 0, 4], sizes = [2, 16, 64], strides = [1, 1, 1]} : vector<2x18x72xf32> to vector<2x16x64xf32>
    %12 = vector.shape_cast %10 : vector<1x64xf32> to vector<1x1x64xf32>
    %13 = vector.broadcast %12 : vector<1x1x64xf32> to vector<2x16x64xf32>
    %14 = arith.mulf %11, %13 : vector<2x16x64xf32>
    %15 = arith.addf %9, %14 : vector<2x16x64xf32>
    %c2 = arith.constant 2 : index
    %c0_6 = arith.constant 0 : index
    %16 = vector.load %arg1[%c2, %c0_6] : memref<22x64xf32, #tpu.memory_space<vmem>>, vector<1x64xf32>
    %17 = vector.extract_strided_slice %0 {offsets = [0, 0, 8], sizes = [2, 16, 64], strides = [1, 1, 1]} : vector<2x18x72xf32> to vector<2x16x64xf32>
    %18 = vector.shape_cast %16 : vector<1x64xf32> to vector<1x1x64xf32>
    %19 = vector.broadcast %18 : vector<1x1x64xf32> to vector<2x16x64xf32>
    %20 = arith.mulf %17, %19 : vector<2x16x64xf32>
    %21 = arith.addf %15, %20 : vector<2x16x64xf32>
    %c3 = arith.constant 3 : index
    %c0_7 = arith.constant 0 : index
    %22 = vector.load %arg1[%c3, %c0_7] : memref<22x64xf32, #tpu.memory_space<vmem>>, vector<1x64xf32>
    %23 = vector.extract_strided_slice %0 {offsets = [0, 1, 0], sizes = [2, 16, 64], strides = [1, 1, 1]} : vector<2x18x72xf32> to vector<2x16x64xf32>
    %24 = vector.shape_cast %22 : vector<1x64xf32> to vector<1x1x64xf32>
    %25 = vector.broadcast %24 : vector<1x1x64xf32> to vector<2x16x64xf32>
    %26 = arith.mulf %23, %25 : vector<2x16x64xf32>
    %27 = arith.addf %21, %26 : vector<2x16x64xf32>
    %c4 = arith.constant 4 : index
    %c0_8 = arith.constant 0 : index
    %28 = vector.load %arg1[%c4, %c0_8] : memref<22x64xf32, #tpu.memory_space<vmem>>, vector<1x64xf32>
    %29 = vector.extract_strided_slice %0 {offsets = [0, 1, 4], sizes = [2, 16, 64], strides = [1, 1, 1]} : vector<2x18x72xf32> to vector<2x16x64xf32>
    %30 = vector.shape_cast %28 : vector<1x64xf32> to vector<1x1x64xf32>
    %31 = vector.broadcast %30 : vector<1x1x64xf32> to vector<2x16x64xf32>
    %32 = arith.mulf %29, %31 : vector<2x16x64xf32>
    %33 = arith.addf %27, %32 : vector<2x16x64xf32>
    %c5 = arith.constant 5 : index
    %c0_9 = arith.constant 0 : index
    %34 = vector.load %arg1[%c5, %c0_9] : memref<22x64xf32, #tpu.memory_space<vmem>>, vector<1x64xf32>
    %35 = vector.extract_strided_slice %0 {offsets = [0, 1, 8], sizes = [2, 16, 64], strides = [1, 1, 1]} : vector<2x18x72xf32> to vector<2x16x64xf32>
    %36 = vector.shape_cast %34 : vector<1x64xf32> to vector<1x1x64xf32>
    %37 = vector.broadcast %36 : vector<1x1x64xf32> to vector<2x16x64xf32>
    %38 = arith.mulf %35, %37 : vector<2x16x64xf32>
    %39 = arith.addf %33, %38 : vector<2x16x64xf32>
    %c6 = arith.constant 6 : index
    %c0_10 = arith.constant 0 : index
    %40 = vector.load %arg1[%c6, %c0_10] : memref<22x64xf32, #tpu.memory_space<vmem>>, vector<1x64xf32>
    %41 = vector.extract_strided_slice %0 {offsets = [0, 2, 0], sizes = [2, 16, 64], strides = [1, 1, 1]} : vector<2x18x72xf32> to vector<2x16x64xf32>
    %42 = vector.shape_cast %40 : vector<1x64xf32> to vector<1x1x64xf32>
    %43 = vector.broadcast %42 : vector<1x1x64xf32> to vector<2x16x64xf32>
    %44 = arith.mulf %41, %43 : vector<2x16x64xf32>
    %45 = arith.addf %39, %44 : vector<2x16x64xf32>
    %c7 = arith.constant 7 : index
    %c0_11 = arith.constant 0 : index
    %46 = vector.load %arg1[%c7, %c0_11] : memref<22x64xf32, #tpu.memory_space<vmem>>, vector<1x64xf32>
    %47 = vector.extract_strided_slice %0 {offsets = [0, 2, 4], sizes = [2, 16, 64], strides = [1, 1, 1]} : vector<2x18x72xf32> to vector<2x16x64xf32>
    %48 = vector.shape_cast %46 : vector<1x64xf32> to vector<1x1x64xf32>
    %49 = vector.broadcast %48 : vector<1x1x64xf32> to vector<2x16x64xf32>
    %50 = arith.mulf %47, %49 : vector<2x16x64xf32>
    %51 = arith.addf %45, %50 : vector<2x16x64xf32>
    %c8 = arith.constant 8 : index
    %c0_12 = arith.constant 0 : index
    %52 = vector.load %arg1[%c8, %c0_12] : memref<22x64xf32, #tpu.memory_space<vmem>>, vector<1x64xf32>
    %53 = vector.extract_strided_slice %0 {offsets = [0, 2, 8], sizes = [2, 16, 64], strides = [1, 1, 1]} : vector<2x18x72xf32> to vector<2x16x64xf32>
    %54 = vector.shape_cast %52 : vector<1x64xf32> to vector<1x1x64xf32>
    %55 = vector.broadcast %54 : vector<1x1x64xf32> to vector<2x16x64xf32>
    %56 = arith.mulf %53, %55 : vector<2x16x64xf32>
    %57 = arith.addf %51, %56 : vector<2x16x64xf32>
    %c10 = arith.constant 10 : index
    %c0_13 = arith.constant 0 : index
    %58 = vector.load %arg1[%c10, %c0_13] : memref<22x64xf32, #tpu.memory_space<vmem>>, vector<1x64xf32>
    %c11 = arith.constant 11 : index
    %c0_14 = arith.constant 0 : index
    %59 = vector.load %arg1[%c11, %c0_14] : memref<22x64xf32, #tpu.memory_space<vmem>>, vector<1x64xf32>
    %cst = arith.constant dense<0.000000e+00> : vector<2x64xf32>
    %60 = vector.multi_reduction <add>, %57, %cst [1] : vector<2x16x64xf32> to vector<2x64xf32>
    %61 = vector.shape_cast %60 : vector<2x64xf32> to vector<2x1x64xf32>
    %62 = arith.mulf %57, %57 : vector<2x16x64xf32>
    %cst_15 = arith.constant dense<0.000000e+00> : vector<2x64xf32>
    %63 = vector.multi_reduction <add>, %62, %cst_15 [1] : vector<2x16x64xf32> to vector<2x64xf32>
    %64 = vector.shape_cast %63 : vector<2x64xf32> to vector<2x1x64xf32>
    %65 = tpu.concatenate %61, %64 in 1 : vector<2x1x64xf32>, vector<2x1x64xf32> -> vector<2x2x64xf32>
    %66 = vector.extract_strided_slice %65 {offsets = [0, 0, 0], sizes = [1, 2, 64], strides = [1, 1, 1]} : vector<2x2x64xf32> to vector<1x2x64xf32>
    %67 = vector.extract_strided_slice %65 {offsets = [1, 0, 0], sizes = [1, 2, 64], strides = [1, 1, 1]} : vector<2x2x64xf32> to vector<1x2x64xf32>
    %68 = arith.addf %66, %67 : vector<1x2x64xf32>
    %69 = vector.extract_strided_slice %68 {offsets = [0, 0, 32], sizes = [1, 2, 32], strides = [1, 1, 1]} : vector<1x2x64xf32> to vector<1x2x32xf32>
    %70 = vector.extract_strided_slice %68 {offsets = [0, 0, 0], sizes = [1, 2, 32], strides = [1, 1, 1]} : vector<1x2x64xf32> to vector<1x2x32xf32>
    %71 = tpu.concatenate %69, %70 in 2 : vector<1x2x32xf32>, vector<1x2x32xf32> -> vector<1x2x64xf32>
    %72 = arith.addf %68, %71 : vector<1x2x64xf32>
    %73 = vector.extract_strided_slice %72 {offsets = [0, 0, 48], sizes = [1, 2, 16], strides = [1, 1, 1]} : vector<1x2x64xf32> to vector<1x2x16xf32>
    %74 = vector.extract_strided_slice %72 {offsets = [0, 0, 0], sizes = [1, 2, 48], strides = [1, 1, 1]} : vector<1x2x64xf32> to vector<1x2x48xf32>
    %75 = tpu.concatenate %73, %74 in 2 : vector<1x2x16xf32>, vector<1x2x48xf32> -> vector<1x2x64xf32>
    %76 = arith.addf %72, %75 : vector<1x2x64xf32>
    %77 = vector.extract_strided_slice %76 {offsets = [0, 0, 56], sizes = [1, 2, 8], strides = [1, 1, 1]} : vector<1x2x64xf32> to vector<1x2x8xf32>
    %78 = vector.extract_strided_slice %76 {offsets = [0, 0, 0], sizes = [1, 2, 56], strides = [1, 1, 1]} : vector<1x2x64xf32> to vector<1x2x56xf32>
    %79 = tpu.concatenate %77, %78 in 2 : vector<1x2x8xf32>, vector<1x2x56xf32> -> vector<1x2x64xf32>
    %80 = arith.addf %76, %79 : vector<1x2x64xf32>
    %81 = vector.extract_strided_slice %80 {offsets = [0, 0, 60], sizes = [1, 2, 4], strides = [1, 1, 1]} : vector<1x2x64xf32> to vector<1x2x4xf32>
    %82 = vector.extract_strided_slice %80 {offsets = [0, 0, 0], sizes = [1, 2, 60], strides = [1, 1, 1]} : vector<1x2x64xf32> to vector<1x2x60xf32>
    %83 = tpu.concatenate %81, %82 in 2 : vector<1x2x4xf32>, vector<1x2x60xf32> -> vector<1x2x64xf32>
    %84 = arith.addf %80, %83 : vector<1x2x64xf32>
    %85 = vector.extract_strided_slice %84 {offsets = [0, 0, 0], sizes = [1, 1, 64], strides = [1, 1, 1]} : vector<1x2x64xf32> to vector<1x1x64xf32>
    %cst_16 = arith.constant 0.001953125 : f32
    %86 = vector.broadcast %cst_16 : f32 to vector<1x1x64xf32>
    %87 = arith.mulf %85, %86 : vector<1x1x64xf32>
    %88 = vector.extract_strided_slice %84 {offsets = [0, 1, 0], sizes = [1, 1, 64], strides = [1, 1, 1]} : vector<1x2x64xf32> to vector<1x1x64xf32>
    %cst_17 = arith.constant 0.001953125 : f32
    %89 = vector.broadcast %cst_17 : f32 to vector<1x1x64xf32>
    %90 = arith.mulf %88, %89 : vector<1x1x64xf32>
    %91 = arith.mulf %87, %87 : vector<1x1x64xf32>
    %92 = arith.subf %90, %91 : vector<1x1x64xf32>
    %cst_18 = arith.constant 9.99999974E-6 : f32
    %93 = vector.broadcast %cst_18 : f32 to vector<1x1x64xf32>
    %94 = arith.addf %92, %93 : vector<1x1x64xf32>
    %95 = math.rsqrt %94 : vector<1x1x64xf32>
    %96 = vector.shape_cast %58 : vector<1x64xf32> to vector<1x1x64xf32>
    %97 = arith.mulf %95, %96 : vector<1x1x64xf32>
    %98 = arith.mulf %87, %97 : vector<1x1x64xf32>
    %99 = vector.shape_cast %59 : vector<1x64xf32> to vector<1x1x64xf32>
    %100 = arith.subf %99, %98 : vector<1x1x64xf32>
    %101 = vector.broadcast %97 : vector<1x1x64xf32> to vector<2x16x64xf32>
    %102 = arith.mulf %57, %101 : vector<2x16x64xf32>
    %103 = vector.broadcast %100 : vector<1x1x64xf32> to vector<2x16x64xf32>
    %104 = arith.addf %102, %103 : vector<2x16x64xf32>
    %cst_19 = arith.constant 0.000000e+00 : f32
    %105 = vector.broadcast %cst_19 : f32 to vector<2x16x64xf32>
    %106 = arith.maximumf %104, %105 : vector<2x16x64xf32>
    %c19 = arith.constant 19 : index
    %c0_20 = arith.constant 0 : index
    %107 = vector.load %arg1[%c19, %c0_20] : memref<22x64xf32, #tpu.memory_space<vmem>>, vector<1x64xf32>
    %c15 = arith.constant 15 : index
    %c0_21 = arith.constant 0 : index
    %108 = vector.load %arg1[%c15, %c0_21] : memref<22x64xf32, #tpu.memory_space<vmem>>, vector<1x64xf32>
    %109 = vector.shape_cast %108 : vector<1x64xf32> to vector<1x1x64xf32>
    %110 = vector.broadcast %109 : vector<1x1x64xf32> to vector<2x16x64xf32>
    %111 = arith.mulf %106, %110 : vector<2x16x64xf32>
    %112 = vector.shape_cast %107 : vector<1x64xf32> to vector<1x1x64xf32>
    %113 = vector.broadcast %112 : vector<1x1x64xf32> to vector<2x16x64xf32>
    %114 = arith.addf %111, %113 : vector<2x16x64xf32>
    %c12 = arith.constant 12 : index
    %c0_22 = arith.constant 0 : index
    %115 = vector.load %arg1[%c12, %c0_22] : memref<22x64xf32, #tpu.memory_space<vmem>>, vector<1x64xf32>
    %116 = vector.extract_strided_slice %106 {offsets = [0, 0, 61], sizes = [2, 16, 3], strides = [1, 1, 1]} : vector<2x16x64xf32> to vector<2x16x3xf32>
    %117 = vector.extract_strided_slice %106 {offsets = [0, 0, 0], sizes = [2, 16, 61], strides = [1, 1, 1]} : vector<2x16x64xf32> to vector<2x16x61xf32>
    %118 = tpu.concatenate %116, %117 in 2 : vector<2x16x3xf32>, vector<2x16x61xf32> -> vector<2x16x64xf32>
    %119 = vector.shape_cast %115 : vector<1x64xf32> to vector<1x1x64xf32>
    %120 = vector.broadcast %119 : vector<1x1x64xf32> to vector<2x16x64xf32>
    %121 = arith.mulf %118, %120 : vector<2x16x64xf32>
    %122 = arith.addf %114, %121 : vector<2x16x64xf32>
    %c13 = arith.constant 13 : index
    %c0_23 = arith.constant 0 : index
    %123 = vector.load %arg1[%c13, %c0_23] : memref<22x64xf32, #tpu.memory_space<vmem>>, vector<1x64xf32>
    %124 = vector.extract_strided_slice %106 {offsets = [0, 0, 62], sizes = [2, 16, 2], strides = [1, 1, 1]} : vector<2x16x64xf32> to vector<2x16x2xf32>
    %125 = vector.extract_strided_slice %106 {offsets = [0, 0, 0], sizes = [2, 16, 62], strides = [1, 1, 1]} : vector<2x16x64xf32> to vector<2x16x62xf32>
    %126 = tpu.concatenate %124, %125 in 2 : vector<2x16x2xf32>, vector<2x16x62xf32> -> vector<2x16x64xf32>
    %127 = vector.shape_cast %123 : vector<1x64xf32> to vector<1x1x64xf32>
    %128 = vector.broadcast %127 : vector<1x1x64xf32> to vector<2x16x64xf32>
    %129 = arith.mulf %126, %128 : vector<2x16x64xf32>
    %130 = arith.addf %122, %129 : vector<2x16x64xf32>
    %c14 = arith.constant 14 : index
    %c0_24 = arith.constant 0 : index
    %131 = vector.load %arg1[%c14, %c0_24] : memref<22x64xf32, #tpu.memory_space<vmem>>, vector<1x64xf32>
    %132 = vector.extract_strided_slice %106 {offsets = [0, 0, 63], sizes = [2, 16, 1], strides = [1, 1, 1]} : vector<2x16x64xf32> to vector<2x16x1xf32>
    %133 = vector.extract_strided_slice %106 {offsets = [0, 0, 0], sizes = [2, 16, 63], strides = [1, 1, 1]} : vector<2x16x64xf32> to vector<2x16x63xf32>
    %134 = tpu.concatenate %132, %133 in 2 : vector<2x16x1xf32>, vector<2x16x63xf32> -> vector<2x16x64xf32>
    %135 = vector.shape_cast %131 : vector<1x64xf32> to vector<1x1x64xf32>
    %136 = vector.broadcast %135 : vector<1x1x64xf32> to vector<2x16x64xf32>
    %137 = arith.mulf %134, %136 : vector<2x16x64xf32>
    %138 = arith.addf %130, %137 : vector<2x16x64xf32>
    %c16 = arith.constant 16 : index
    %c0_25 = arith.constant 0 : index
    %139 = vector.load %arg1[%c16, %c0_25] : memref<22x64xf32, #tpu.memory_space<vmem>>, vector<1x64xf32>
    %140 = vector.extract_strided_slice %106 {offsets = [0, 0, 1], sizes = [2, 16, 63], strides = [1, 1, 1]} : vector<2x16x64xf32> to vector<2x16x63xf32>
    %141 = vector.extract_strided_slice %106 {offsets = [0, 0, 0], sizes = [2, 16, 1], strides = [1, 1, 1]} : vector<2x16x64xf32> to vector<2x16x1xf32>
    %142 = tpu.concatenate %140, %141 in 2 : vector<2x16x63xf32>, vector<2x16x1xf32> -> vector<2x16x64xf32>
    %143 = vector.shape_cast %139 : vector<1x64xf32> to vector<1x1x64xf32>
    %144 = vector.broadcast %143 : vector<1x1x64xf32> to vector<2x16x64xf32>
    %145 = arith.mulf %142, %144 : vector<2x16x64xf32>
    %146 = arith.addf %138, %145 : vector<2x16x64xf32>
    %c17 = arith.constant 17 : index
    %c0_26 = arith.constant 0 : index
    %147 = vector.load %arg1[%c17, %c0_26] : memref<22x64xf32, #tpu.memory_space<vmem>>, vector<1x64xf32>
    %148 = vector.extract_strided_slice %106 {offsets = [0, 0, 2], sizes = [2, 16, 62], strides = [1, 1, 1]} : vector<2x16x64xf32> to vector<2x16x62xf32>
    %149 = vector.extract_strided_slice %106 {offsets = [0, 0, 0], sizes = [2, 16, 2], strides = [1, 1, 1]} : vector<2x16x64xf32> to vector<2x16x2xf32>
    %150 = tpu.concatenate %148, %149 in 2 : vector<2x16x62xf32>, vector<2x16x2xf32> -> vector<2x16x64xf32>
    %151 = vector.shape_cast %147 : vector<1x64xf32> to vector<1x1x64xf32>
    %152 = vector.broadcast %151 : vector<1x1x64xf32> to vector<2x16x64xf32>
    %153 = arith.mulf %150, %152 : vector<2x16x64xf32>
    %154 = arith.addf %146, %153 : vector<2x16x64xf32>
    %c18 = arith.constant 18 : index
    %c0_27 = arith.constant 0 : index
    %155 = vector.load %arg1[%c18, %c0_27] : memref<22x64xf32, #tpu.memory_space<vmem>>, vector<1x64xf32>
    %156 = vector.extract_strided_slice %106 {offsets = [0, 0, 3], sizes = [2, 16, 61], strides = [1, 1, 1]} : vector<2x16x64xf32> to vector<2x16x61xf32>
    %157 = vector.extract_strided_slice %106 {offsets = [0, 0, 0], sizes = [2, 16, 3], strides = [1, 1, 1]} : vector<2x16x64xf32> to vector<2x16x3xf32>
    %158 = tpu.concatenate %156, %157 in 2 : vector<2x16x61xf32>, vector<2x16x3xf32> -> vector<2x16x64xf32>
    %159 = vector.shape_cast %155 : vector<1x64xf32> to vector<1x1x64xf32>
    %160 = vector.broadcast %159 : vector<1x1x64xf32> to vector<2x16x64xf32>
    %161 = arith.mulf %158, %160 : vector<2x16x64xf32>
    %162 = arith.addf %154, %161 : vector<2x16x64xf32>
    %c20 = arith.constant 20 : index
    %c0_28 = arith.constant 0 : index
    %163 = vector.load %arg1[%c20, %c0_28] : memref<22x64xf32, #tpu.memory_space<vmem>>, vector<1x64xf32>
    %c21 = arith.constant 21 : index
    %c0_29 = arith.constant 0 : index
    %164 = vector.load %arg1[%c21, %c0_29] : memref<22x64xf32, #tpu.memory_space<vmem>>, vector<1x64xf32>
    %cst_30 = arith.constant dense<0.000000e+00> : vector<2x64xf32>
    %165 = vector.multi_reduction <add>, %162, %cst_30 [1] : vector<2x16x64xf32> to vector<2x64xf32>
    %166 = vector.shape_cast %165 : vector<2x64xf32> to vector<2x1x64xf32>
    %167 = arith.mulf %162, %162 : vector<2x16x64xf32>
    %cst_31 = arith.constant dense<0.000000e+00> : vector<2x64xf32>
    %168 = vector.multi_reduction <add>, %167, %cst_31 [1] : vector<2x16x64xf32> to vector<2x64xf32>
    %169 = vector.shape_cast %168 : vector<2x64xf32> to vector<2x1x64xf32>
    %170 = tpu.concatenate %166, %169 in 1 : vector<2x1x64xf32>, vector<2x1x64xf32> -> vector<2x2x64xf32>
    %171 = vector.extract_strided_slice %170 {offsets = [0, 0, 0], sizes = [1, 2, 64], strides = [1, 1, 1]} : vector<2x2x64xf32> to vector<1x2x64xf32>
    %172 = vector.extract_strided_slice %170 {offsets = [1, 0, 0], sizes = [1, 2, 64], strides = [1, 1, 1]} : vector<2x2x64xf32> to vector<1x2x64xf32>
    %173 = arith.addf %171, %172 : vector<1x2x64xf32>
    %174 = vector.extract_strided_slice %173 {offsets = [0, 0, 32], sizes = [1, 2, 32], strides = [1, 1, 1]} : vector<1x2x64xf32> to vector<1x2x32xf32>
    %175 = vector.extract_strided_slice %173 {offsets = [0, 0, 0], sizes = [1, 2, 32], strides = [1, 1, 1]} : vector<1x2x64xf32> to vector<1x2x32xf32>
    %176 = tpu.concatenate %174, %175 in 2 : vector<1x2x32xf32>, vector<1x2x32xf32> -> vector<1x2x64xf32>
    %177 = arith.addf %173, %176 : vector<1x2x64xf32>
    %178 = vector.extract_strided_slice %177 {offsets = [0, 0, 48], sizes = [1, 2, 16], strides = [1, 1, 1]} : vector<1x2x64xf32> to vector<1x2x16xf32>
    %179 = vector.extract_strided_slice %177 {offsets = [0, 0, 0], sizes = [1, 2, 48], strides = [1, 1, 1]} : vector<1x2x64xf32> to vector<1x2x48xf32>
    %180 = tpu.concatenate %178, %179 in 2 : vector<1x2x16xf32>, vector<1x2x48xf32> -> vector<1x2x64xf32>
    %181 = arith.addf %177, %180 : vector<1x2x64xf32>
    %182 = vector.extract_strided_slice %181 {offsets = [0, 0, 56], sizes = [1, 2, 8], strides = [1, 1, 1]} : vector<1x2x64xf32> to vector<1x2x8xf32>
    %183 = vector.extract_strided_slice %181 {offsets = [0, 0, 0], sizes = [1, 2, 56], strides = [1, 1, 1]} : vector<1x2x64xf32> to vector<1x2x56xf32>
    %184 = tpu.concatenate %182, %183 in 2 : vector<1x2x8xf32>, vector<1x2x56xf32> -> vector<1x2x64xf32>
    %185 = arith.addf %181, %184 : vector<1x2x64xf32>
    %186 = vector.extract_strided_slice %185 {offsets = [0, 0, 60], sizes = [1, 2, 4], strides = [1, 1, 1]} : vector<1x2x64xf32> to vector<1x2x4xf32>
    %187 = vector.extract_strided_slice %185 {offsets = [0, 0, 0], sizes = [1, 2, 60], strides = [1, 1, 1]} : vector<1x2x64xf32> to vector<1x2x60xf32>
    %188 = tpu.concatenate %186, %187 in 2 : vector<1x2x4xf32>, vector<1x2x60xf32> -> vector<1x2x64xf32>
    %189 = arith.addf %185, %188 : vector<1x2x64xf32>
    %190 = vector.extract_strided_slice %189 {offsets = [0, 0, 0], sizes = [1, 1, 64], strides = [1, 1, 1]} : vector<1x2x64xf32> to vector<1x1x64xf32>
    %cst_32 = arith.constant 0.001953125 : f32
    %191 = vector.broadcast %cst_32 : f32 to vector<1x1x64xf32>
    %192 = arith.mulf %190, %191 : vector<1x1x64xf32>
    %193 = vector.extract_strided_slice %189 {offsets = [0, 1, 0], sizes = [1, 1, 64], strides = [1, 1, 1]} : vector<1x2x64xf32> to vector<1x1x64xf32>
    %cst_33 = arith.constant 0.001953125 : f32
    %194 = vector.broadcast %cst_33 : f32 to vector<1x1x64xf32>
    %195 = arith.mulf %193, %194 : vector<1x1x64xf32>
    %196 = arith.mulf %192, %192 : vector<1x1x64xf32>
    %197 = arith.subf %195, %196 : vector<1x1x64xf32>
    %cst_34 = arith.constant 9.99999974E-6 : f32
    %198 = vector.broadcast %cst_34 : f32 to vector<1x1x64xf32>
    %199 = arith.addf %197, %198 : vector<1x1x64xf32>
    %200 = math.rsqrt %199 : vector<1x1x64xf32>
    %201 = vector.shape_cast %163 : vector<1x64xf32> to vector<1x1x64xf32>
    %202 = arith.mulf %200, %201 : vector<1x1x64xf32>
    %203 = arith.mulf %192, %202 : vector<1x1x64xf32>
    %204 = vector.shape_cast %164 : vector<1x64xf32> to vector<1x1x64xf32>
    %205 = arith.subf %204, %203 : vector<1x1x64xf32>
    %206 = vector.broadcast %202 : vector<1x1x64xf32> to vector<2x16x64xf32>
    %207 = arith.mulf %162, %206 : vector<2x16x64xf32>
    %208 = vector.broadcast %205 : vector<1x1x64xf32> to vector<2x16x64xf32>
    %209 = arith.addf %207, %208 : vector<2x16x64xf32>
    %cst_35 = arith.constant 0.000000e+00 : f32
    %210 = vector.broadcast %cst_35 : f32 to vector<2x16x64xf32>
    %211 = arith.maximumf %209, %210 : vector<2x16x64xf32>
    %c0_36 = arith.constant 0 : index
    %c0_37 = arith.constant 0 : index
    %c0_38 = arith.constant 0 : index
    %212 = vector.load %arg2[%c0_36, %c0_37, %c0_38] : memref<2x16x64xf32, #tpu.memory_space<vmem>>, vector<2x16x64xf32>
    tpu.vector_store %arg2[%c0_36, %c0_37, %c0_38], %211 {strides = array<i32>} : memref<2x16x64xf32, #tpu.memory_space<vmem>>, vector<2x16x64xf32>,
    return
  }
}

</mosaic_0001>

<llo_original>
// kernel: tpu_custom_call.1
$region0: #{tpu_custom_call.1}
  #allocation0 [shape = 'u32[]', space=smem, size = 0x4, offset = 0x4, fixed_abs, tag = 'smem constant byte address 0x4 - core index']
  #allocation1 [shape = 'u32[144,128]{1,0:T(1,128)}', space=vmem, size = 0x12000, scoped, tag = 'internal scratch']
  %s0 = inlined_call_operand.vmem [shape: f32[2,18,72], index: 0, kind: input, shape index: {}]
  %s1 = inlined_call_operand.vmem [shape: f32[22,64], index: 1, kind: input, shape index: {}]
  %s2 = inlined_call_operand.hbm [shape: f32[2,16,64], index: 2, kind: output, shape index: {}]
  %s3 = sld [smem:[#allocation0]]
  $region18: #{tpu_custom_call.1} parent=0
    _
  %s5 = ssub.s32 1, %s3
  %s6 = scalar_select 0, %s5, %s3
  $region1: #{tpu_custom_call.1} parent=0
    #allocation2 [shape = 'u8[16384]{0}', space=vmem, size = 0x4000, scoped, tag = 'output window, operand 0, single buffered']
    #allocation3 [shape = 's32[1]{0}', space=sflag, size = 0x4, scoped, tag = 'scoped memory for tpu_custom_call.1']
    %7 = vsyncpa [#allocation3], 0
    // Predicated region
    $region2: #{tpu_custom_call.1} parent=1 // pred_check
      _
    $region3: #{tpu_custom_call.1} parent=1 // pred_check_branch
      %9 = sbr.rel (0) target = $region5
    $region4: #{tpu_custom_call.1} parent=1 // pred_region
      _
    $region5: #{tpu_custom_call.1} parent=1 // pred_fallthru
      _
    // Predicated region
    $region6: #{tpu_custom_call.1} parent=1 // pred_check
      _
    $region7: #{tpu_custom_call.1} parent=1 // pred_check_branch
      %11 = sbr.rel (0) target = $region9
    $region8: #{tpu_custom_call.1} parent=1 // pred_region
      _
    $region9: #{tpu_custom_call.1} parent=1 // pred_fallthru
      _
    %v12 = vld [vmem:[%s0] sm:$0xff]
    %v13 = vld [vmem:[%s0 + $0x8] sm:$0xff]
    %v14 = vld [vmem:[%s0 + $0x10] sm:$0x3]
    %v15 = vld [vmem:[%s0 + $0x18] sm:$0xff]
    %v16 = vld [vmem:[%s0 + $0x20] sm:$0xff]
    %v17 = vld [vmem:[%s0 + $0x28] sm:$0x3]
    %v18 = vld [vmem:[%s1 + $0x9] sm:$0x1]
    %v19 = vld [vmem:[%s1] sm:$0x1]
    %v20 = vlaneseq
    %v21 = vshrl.u32 %v20, 7
    %v22 = vsub.s32 0, %v21
    %v23 = vrot.slane %v19, %v22
    %v24 = vmul.f32 %v12, %v23
    %v25 = vmul.f32 %v13, %v23
    %v26 = vmul.f32 %v15, %v23
    %v27 = vmul.f32 %v16, %v23
    %v28 = vlaneseq
    %v29 = vshrl.u32 %v28, 7
    %v30 = vsub.s32 0, %v29
    %v31 = vrot.slane %v18, %v30
    %v32 = vadd.f32 %v24, %v31
    %v33 = vadd.f32 %v25, %v31
    %v34 = vadd.f32 %v26, %v31
    %v35 = vadd.f32 %v27, %v31
    %v36 = vld [vmem:[%s1 + $0x1] sm:$0x1]
    %v37 = vlaneseq
    %v38 = vshrl.u32 %v37, 7
    %v39 = vsub.s32 0, %v38
    %v40 = vrot.slane %v36, %v39
    %42 = vrot.lane.b32.xlu0 %v40, 4
    %v43 = vpop.permute.xlu0 %42
    %v45 = vmul.f32 %v12, %v43
    %v46 = vmul.f32 %v13, %v43
    %v47 = vmul.f32 %v15, %v43
    %v48 = vmul.f32 %v16, %v43
    %53 = vrot.lane.b32.xlu0 %v45, 124
    %v54 = vpop.permute.xlu0 %53
    %55 = vrot.lane.b32.xlu0 %v46, 124
    %v56 = vpop.permute.xlu0 %55
    %57 = vrot.lane.b32.xlu0 %v47, 124
    %v58 = vpop.permute.xlu0 %57
    %59 = vrot.lane.b32.xlu0 %v48, 124
    %v60 = vpop.permute.xlu0 %59
    %v65 = vadd.f32 %v32, %v54
    %v66 = vadd.f32 %v33, %v56
    %v67 = vadd.f32 %v34, %v58
    %v68 = vadd.f32 %v35, %v60
    %v69 = vld [vmem:[%s1 + $0x2] sm:$0x1]
    %v70 = vlaneseq
    %v71 = vshrl.u32 %v70, 7
    %v72 = vsub.s32 0, %v71
    %v73 = vrot.slane %v69, %v72
    %75 = vrot.lane.b32.xlu0 %v73, 8
    %v76 = vpop.permute.xlu0 %75
    %v78 = vmul.f32 %v12, %v76
    %v79 = vmul.f32 %v13, %v76
    %v80 = vmul.f32 %v15, %v76
    %v81 = vmul.f32 %v16, %v76
    %86 = vrot.lane.b32.xlu0 %v78, 120
    %v87 = vpop.permute.xlu0 %86
    %88 = vrot.lane.b32.xlu0 %v79, 120
    %v89 = vpop.permute.xlu0 %88
    %90 = vrot.lane.b32.xlu0 %v80, 120
    %v91 = vpop.permute.xlu0 %90
    %92 = vrot.lane.b32.xlu0 %v81, 120
    %v93 = vpop.permute.xlu0 %92
    %v98 = vadd.f32 %v65, %v87
    %v99 = vadd.f32 %v66, %v89
    %v100 = vadd.f32 %v67, %v91
    %v101 = vadd.f32 %v68, %v93
    %v102 = vld [vmem:[%s1 + $0x3] sm:$0x1]
    %v103 = vlaneseq
    %v104 = vshrl.u32 %v103, 7
    %v105 = vsub.s32 0, %v104
    %v106 = vrot.slane %v102, %v105
    %v107 = vmul.f32 %v12, %v106
    %v108 = vmul.f32 %v13, %v106
    %v109 = vmul.f32 %v14, %v106
    %v110 = vmul.f32 %v15, %v106
    %v111 = vmul.f32 %v16, %v106
    %v112 = vmul.f32 %v17, %v106
    %vm119 = vcmask 1046528
    %v120 = vrot.slane %v107, 1
    %v121 = vrot.slane %v108, 1
    %v122 = vsel %vm119, %v120, %v121
    %v123 = vrot.slane %v109, 1
    %v124 = vsel %vm119, %v121, %v123
    %v125 = vrot.slane %v110, 1
    %v126 = vrot.slane %v111, 1
    %v127 = vsel %vm119, %v125, %v126
    %v128 = vrot.slane %v112, 1
    %v129 = vsel %vm119, %v126, %v128
    %v134 = vadd.f32 %v98, %v122
    %v135 = vadd.f32 %v99, %v124
    %v136 = vadd.f32 %v100, %v127
    %v137 = vadd.f32 %v101, %v129
    %v138 = vld [vmem:[%s1 + $0x4] sm:$0x1]
    %v139 = vlaneseq
    %v140 = vshrl.u32 %v139, 7
    %v141 = vsub.s32 0, %v140
    %v142 = vrot.slane %v138, %v141
    %144 = vrot.lane.b32.xlu0 %v142, 4
    %v145 = vpop.permute.xlu0 %144
    %v147 = vmul.f32 %v12, %v145
    %v148 = vmul.f32 %v13, %v145
    %v149 = vmul.f32 %v14, %v145
    %v150 = vmul.f32 %v15, %v145
    %v151 = vmul.f32 %v16, %v145
    %v152 = vmul.f32 %v17, %v145
    %v159 = vrot.slane %v147, 1
    %v160 = vrot.slane %v148, 1
    %v161 = vsel %vm119, %v159, %v160
    %v162 = vrot.slane %v149, 1
    %v163 = vsel %vm119, %v160, %v162
    %v164 = vrot.slane %v150, 1
    %v165 = vrot.slane %v151, 1
    %v166 = vsel %vm119, %v164, %v165
    %v167 = vrot.slane %v152, 1
    %v168 = vsel %vm119, %v165, %v167
    %169 = vrot.lane.b32.xlu0 %v161, 124
    %v170 = vpop.permute.xlu0 %169
    %171 = vrot.lane.b32.xlu0 %v163, 124
    %v172 = vpop.permute.xlu0 %171
    %173 = vrot.lane.b32.xlu0 %v166, 124
    %v174 = vpop.permute.xlu0 %173
    %175 = vrot.lane.b32.xlu0 %v168, 124
    %v176 = vpop.permute.xlu0 %175
    %v181 = vadd.f32 %v134, %v170
    %v182 = vadd.f32 %v135, %v172
    %v183 = vadd.f32 %v136, %v174
    %v184 = vadd.f32 %v137, %v176
    %v185 = vld [vmem:[%s1 + $0x5] sm:$0x1]
    %v186 = vlaneseq
    %v187 = vshrl.u32 %v186, 7
    %v188 = vsub.s32 0, %v187
    %v189 = vrot.slane %v185, %v188
    %191 = vrot.lane.b32.xlu0 %v189, 8
    %v192 = vpop.permute.xlu0 %191
    %v194 = vmul.f32 %v12, %v192
    %v195 = vmul.f32 %v13, %v192
    %v196 = vmul.f32 %v14, %v192
    %v197 = vmul.f32 %v15, %v192
    %v198 = vmul.f32 %v16, %v192
    %v199 = vmul.f32 %v17, %v192
    %v206 = vrot.slane %v194, 1
    %v207 = vrot.slane %v195, 1
    %v208 = vsel %vm119, %v206, %v207
    %v209 = vrot.slane %v196, 1
    %v210 = vsel %vm119, %v207, %v209
    %v211 = vrot.slane %v197, 1
    %v212 = vrot.slane %v198, 1
    %v213 = vsel %vm119, %v211, %v212
    %v214 = vrot.slane %v199, 1
    %v215 = vsel %vm119, %v212, %v214
    %216 = vrot.lane.b32.xlu0 %v208, 120
    %v217 = vpop.permute.xlu0 %216
    %218 = vrot.lane.b32.xlu0 %v210, 120
    %v219 = vpop.permute.xlu0 %218
    %220 = vrot.lane.b32.xlu0 %v213, 120
    %v221 = vpop.permute.xlu0 %220
    %222 = vrot.lane.b32.xlu0 %v215, 120
    %v223 = vpop.permute.xlu0 %222
    %v228 = vadd.f32 %v181, %v217
    %v229 = vadd.f32 %v182, %v219
    %v230 = vadd.f32 %v183, %v221
    %v231 = vadd.f32 %v184, %v223
    %v232 = vld [vmem:[%s1 + $0x6] sm:$0x1]
    %v233 = vlaneseq
    %v234 = vshrl.u32 %v233, 7
    %v235 = vsub.s32 0, %v234
    %v236 = vrot.slane %v232, %v235
    %v237 = vmul.f32 %v12, %v236
    %v238 = vmul.f32 %v13, %v236
    %v239 = vmul.f32 %v14, %v236
    %v240 = vmul.f32 %v15, %v236
    %v241 = vmul.f32 %v16, %v236
    %v242 = vmul.f32 %v17, %v236
    %vm249 = vcmask 1045504
    %v250 = vrot.slane %v237, 2
    %v251 = vrot.slane %v238, 2
    %v252 = vsel %vm249, %v250, %v251
    %v253 = vrot.slane %v239, 2
    %v254 = vsel %vm249, %v251, %v253
    %v255 = vrot.slane %v240, 2
    %v256 = vrot.slane %v241, 2
    %v257 = vsel %vm249, %v255, %v256
    %v258 = vrot.slane %v242, 2
    %v259 = vsel %vm249, %v256, %v258
    %v264 = vadd.f32 %v228, %v252
    %v265 = vadd.f32 %v229, %v254
    %v266 = vadd.f32 %v230, %v257
    %v267 = vadd.f32 %v231, %v259
    %v268 = vld [vmem:[%s1 + $0x7] sm:$0x1]
    %v269 = vlaneseq
    %v270 = vshrl.u32 %v269, 7
    %v271 = vsub.s32 0, %v270
    %v272 = vrot.slane %v268, %v271
    %274 = vrot.lane.b32.xlu0 %v272, 4
    %v275 = vpop.permute.xlu0 %274
    %v277 = vmul.f32 %v12, %v275
    %v278 = vmul.f32 %v13, %v275
    %v279 = vmul.f32 %v14, %v275
    %v280 = vmul.f32 %v15, %v275
    %v281 = vmul.f32 %v16, %v275
    %v282 = vmul.f32 %v17, %v275
    %v289 = vrot.slane %v277, 2
    %v290 = vrot.slane %v278, 2
    %v291 = vsel %vm249, %v289, %v290
    %v292 = vrot.slane %v279, 2
    %v293 = vsel %vm249, %v290, %v292
    %v294 = vrot.slane %v280, 2
    %v295 = vrot.slane %v281, 2
    %v296 = vsel %vm249, %v294, %v295
    %v297 = vrot.slane %v282, 2
    %v298 = vsel %vm249, %v295, %v297
    %299 = vrot.lane.b32.xlu0 %v291, 124
    %v300 = vpop.permute.xlu0 %299
    %301 = vrot.lane.b32.xlu0 %v293, 124
    %v302 = vpop.permute.xlu0 %301
    %303 = vrot.lane.b32.xlu0 %v296, 124
    %v304 = vpop.permute.xlu0 %303
    %305 = vrot.lane.b32.xlu0 %v298, 124
    %v306 = vpop.permute.xlu0 %305
    %v311 = vadd.f32 %v264, %v300
    %v312 = vadd.f32 %v265, %v302
    %v313 = vadd.f32 %v266, %v304
    %v314 = vadd.f32 %v267, %v306
    %v315 = vld [vmem:[%s1 + $0x8] sm:$0x1]
    %v316 = vlaneseq
    %v317 = vshrl.u32 %v316, 7
    %v318 = vsub.s32 0, %v317
    %v319 = vrot.slane %v315, %v318
    %321 = vrot.lane.b32.xlu0 %v319, 8
    %v322 = vpop.permute.xlu0 %321
    %v324 = vmul.f32 %v12, %v322
    %v325 = vmul.f32 %v13, %v322
    %v326 = vmul.f32 %v14, %v322
    %v327 = vmul.f32 %v15, %v322
    %v328 = vmul.f32 %v16, %v322
    %v329 = vmul.f32 %v17, %v322
    %v336 = vrot.slane %v324, 2
    %v337 = vrot.slane %v325, 2
    %v338 = vsel %vm249, %v336, %v337
    %v339 = vrot.slane %v326, 2
    %v340 = vsel %vm249, %v337, %v339
    %v341 = vrot.slane %v327, 2
    %v342 = vrot.slane %v328, 2
    %v343 = vsel %vm249, %v341, %v342
    %v344 = vrot.slane %v329, 2
    %v345 = vsel %vm249, %v342, %v344
    %346 = vrot.lane.b32.xlu0 %v338, 120
    %v347 = vpop.permute.xlu0 %346
    %348 = vrot.lane.b32.xlu0 %v340, 120
    %v349 = vpop.permute.xlu0 %348
    %350 = vrot.lane.b32.xlu0 %v343, 120
    %v351 = vpop.permute.xlu0 %350
    %352 = vrot.lane.b32.xlu0 %v345, 120
    %v353 = vpop.permute.xlu0 %352
    %v358 = vadd.f32 %v311, %v347
    %v359 = vadd.f32 %v312, %v349
    %v360 = vadd.f32 %v313, %v351
    %v361 = vadd.f32 %v314, %v353
    %v362 = vld [vmem:[%s1 + $0xa] sm:$0x1]
    %v363 = vld [vmem:[%s1 + $0xb] sm:$0x1]
    %vm364 = vcmask 523264
    %v365 = vsel %vm364, %v358, 0.0
    %v366 = vsel %vm364, %v359, 0.0
    %v367 = vadd.f32 %v365, %v366
    %v368 = vrot.slane %v367, 4
    %v369 = vadd.f32 %v367, %v368
    %v370 = vrot.slane %v369, 2
    %v371 = vadd.f32 %v369, %v370
    %v372 = vrot.slane %v371, 1
    %v373 = vadd.f32 %v371, %v372
    %v374 = vsel %vm364, %v360, 0.0
    %v375 = vsel %vm364, %v361, 0.0
    %v376 = vadd.f32 %v374, %v375
    %v377 = vrot.slane %v376, 4
    %v378 = vadd.f32 %v376, %v377
    %v379 = vrot.slane %v378, 2
    %v380 = vadd.f32 %v378, %v379
    %v381 = vrot.slane %v380, 1
    %v382 = vadd.f32 %v380, %v381
    %v383 = vmul.f32 %v358, %v358
    %v384 = vmul.f32 %v359, %v359
    %v385 = vmul.f32 %v360, %v360
    %v386 = vmul.f32 %v361, %v361
    %v387 = vsel %vm364, %v383, 0.0
    %v388 = vsel %vm364, %v384, 0.0
    %v389 = vadd.f32 %v387, %v388
    %v390 = vrot.slane %v389, 4
    %v391 = vadd.f32 %v389, %v390
    %v392 = vrot.slane %v391, 2
    %v393 = vadd.f32 %v391, %v392
    %v394 = vrot.slane %v393, 1
    %v395 = vadd.f32 %v393, %v394
    %v396 = vsel %vm364, %v385, 0.0
    %v397 = vsel %vm364, %v386, 0.0
    %v398 = vadd.f32 %v396, %v397
    %v399 = vrot.slane %v398, 4
    %v400 = vadd.f32 %v398, %v399
    %v401 = vrot.slane %v400, 2
    %v402 = vadd.f32 %v400, %v401
    %v403 = vrot.slane %v402, 1
    %v404 = vadd.f32 %v402, %v403
    %vm405 = vcmask 1040384
    %v406 = vsel %vm405, %v373, %v395
    %v407 = vsel %vm405, %v382, %v404
    %v408 = vadd.f32 %v406, %v407
    %410 = vrot.lane.b32.xlu0 %v408, 96
    %v411 = vpop.permute.xlu0 %410
    %413 = vrot.lane.b32.xlu0 %v408, 32
    %v414 = vpop.permute.xlu0 %413
    %vm416 = vcmask 261120
    %v417 = vsel %vm416, %v411, %v414
    %v418 = vadd.f32 %v408, %v417
    %420 = vrot.lane.b32.xlu0 %v418, 80
    %v421 = vpop.permute.xlu0 %420
    %423 = vrot.lane.b32.xlu0 %v418, 16
    %v424 = vpop.permute.xlu0 %423
    %vm426 = vcmask 130048
    %v427 = vsel %vm426, %v421, %v424
    %v428 = vadd.f32 %v418, %v427
    %430 = vrot.lane.b32.xlu0 %v428, 72
    %v431 = vpop.permute.xlu0 %430
    %433 = vrot.lane.b32.xlu0 %v428, 8
    %v434 = vpop.permute.xlu0 %433
    %vm436 = vcmask 64512
    %v437 = vsel %vm436, %v431, %v434
    %v438 = vadd.f32 %v428, %v437
    %440 = vrot.lane.b32.xlu0 %v438, 68
    %v441 = vpop.permute.xlu0 %440
    %443 = vrot.lane.b32.xlu0 %v438, 4
    %v444 = vpop.permute.xlu0 %443
    %vm446 = vcmask 31744
    %v447 = vsel %vm446, %v441, %v444
    %v448 = vadd.f32 %v438, %v447
    %v449 = vmul.f32 %v448, 0.001953125
    %v450 = vmul.f32 %v449, %v449
    %v452 = vrot.slane %v450, 7
    %v454 = vsub.f32 %v449, %v452
    %v455 = vadd.f32 %v454, 1e-05
    %v456 = vrsqrt.pop %v455
    %v458 = vrot.slane %v362, 7
    %v460 = vmul.f32 %v456, %v458
    %v462 = vrot.slane %v460, 1
    %v464 = vmul.f32 %v449, %v462
    %v465 = vsub.f32 %v363, %v464
    %v466 = vlaneseq
    %v467 = vshrl.u32 %v466, 7
    %v468 = vsub.s32 1, %v467
    %v469 = vrot.slane %v460, %v468
    %v470 = vmul.f32 %v358, %v469
    %v471 = vmul.f32 %v359, %v469
    %v472 = vmul.f32 %v360, %v469
    %v473 = vmul.f32 %v361, %v469
    %v474 = vlaneseq
    %v475 = vshrl.u32 %v474, 7
    %v476 = vsub.s32 0, %v475
    %v477 = vrot.slane %v465, %v476
    %v478 = vadd.f32 %v470, %v477
    %v479 = vadd.f32 %v471, %v477
    %v480 = vadd.f32 %v472, %v477
    %v481 = vadd.f32 %v473, %v477
    %v482 = vmax.f32 %v478, 0.0
    %v483 = vmax.f32 %v479, 0.0
    %v484 = vmax.f32 %v480, 0.0
    %v485 = vmax.f32 %v481, 0.0
    %v486 = vld [vmem:[%s1 + $0x13] sm:$0x1]
    %v487 = vld [vmem:[%s1 + $0xf] sm:$0x1]
    %v488 = vlaneseq
    %v489 = vshrl.u32 %v488, 7
    %v490 = vsub.s32 0, %v489
    %v491 = vrot.slane %v487, %v490
    %v492 = vmul.f32 %v482, %v491
    %v493 = vmul.f32 %v483, %v491
    %v494 = vmul.f32 %v484, %v491
    %v495 = vmul.f32 %v485, %v491
    %v496 = vlaneseq
    %v497 = vshrl.u32 %v496, 7
    %v498 = vsub.s32 0, %v497
    %v499 = vrot.slane %v486, %v498
    %v500 = vadd.f32 %v492, %v499
    %v501 = vadd.f32 %v493, %v499
    %v502 = vadd.f32 %v494, %v499
    %v503 = vadd.f32 %v495, %v499
    %v504 = vld [vmem:[%s1 + $0xc] sm:$0x1]
    %509 = vrot.lane.b32.xlu0 %v482, 67
    %v510 = vpop.permute.xlu0 %509
    %511 = vrot.lane.b32.xlu0 %v483, 67
    %v512 = vpop.permute.xlu0 %511
    %513 = vrot.lane.b32.xlu0 %v484, 67
    %v514 = vpop.permute.xlu0 %513
    %515 = vrot.lane.b32.xlu0 %v485, 67
    %v516 = vpop.permute.xlu0 %515
    %521 = vrot.lane.b32.xlu0 %v482, 3
    %v522 = vpop.permute.xlu0 %521
    %523 = vrot.lane.b32.xlu0 %v483, 3
    %v524 = vpop.permute.xlu0 %523
    %525 = vrot.lane.b32.xlu0 %v484, 3
    %v526 = vpop.permute.xlu0 %525
    %527 = vrot.lane.b32.xlu0 %v485, 3
    %v528 = vpop.permute.xlu0 %527
    %vm533 = vcmask 23552
    %v534 = vsel %vm533, %v510, %v522
    %v535 = vsel %vm533, %v512, %v524
    %v536 = vsel %vm533, %v514, %v526
    %v537 = vsel %vm533, %v516, %v528
    %v538 = vlaneseq
    %v539 = vshrl.u32 %v538, 7
    %v540 = vsub.s32 0, %v539
    %v541 = vrot.slane %v504, %v540
    %v542 = vmul.f32 %v534, %v541
    %v543 = vmul.f32 %v535, %v541
    %v544 = vmul.f32 %v536, %v541
    %v545 = vmul.f32 %v537, %v541
    %v546 = vadd.f32 %v500, %v542
    %v547 = vadd.f32 %v501, %v543
    %v548 = vadd.f32 %v502, %v544
    %v549 = vadd.f32 %v503, %v545
    %v550 = vld [vmem:[%s1 + $0xd] sm:$0x1]
    %551 = vrot.lane.b32.xlu0 %v482, 66
    %v552 = vpop.permute.xlu0 %551
    %553 = vrot.lane.b32.xlu0 %v483, 66
    %v554 = vpop.permute.xlu0 %553
    %555 = vrot.lane.b32.xlu0 %v484, 66
    %v556 = vpop.permute.xlu0 %555
    %557 = vrot.lane.b32.xlu0 %v485, 66
    %v558 = vpop.permute.xlu0 %557
    %563 = vrot.lane.b32.xlu0 %v482, 2
    %v564 = vpop.permute.xlu0 %563
    %565 = vrot.lane.b32.xlu0 %v483, 2
    %v566 = vpop.permute.xlu0 %565
    %567 = vrot.lane.b32.xlu0 %v484, 2
    %v568 = vpop.permute.xlu0 %567
    %569 = vrot.lane.b32.xlu0 %v485, 2
    %v570 = vpop.permute.xlu0 %569
    %vm575 = vcmask 15360
    %v576 = vsel %vm575, %v552, %v564
    %v577 = vsel %vm575, %v554, %v566
    %v578 = vsel %vm575, %v556, %v568
    %v579 = vsel %vm575, %v558, %v570
    %v580 = vlaneseq
    %v581 = vshrl.u32 %v580, 7
    %v582 = vsub.s32 0, %v581
    %v583 = vrot.slane %v550, %v582
    %v584 = vmul.f32 %v576, %v583
    %v585 = vmul.f32 %v577, %v583
    %v586 = vmul.f32 %v578, %v583
    %v587 = vmul.f32 %v579, %v583
    %v588 = vadd.f32 %v546, %v584
    %v589 = vadd.f32 %v547, %v585
    %v590 = vadd.f32 %v548, %v586
    %v591 = vadd.f32 %v549, %v587
    %v592 = vld [vmem:[%s1 + $0xe] sm:$0x1]
    %593 = vrot.lane.b32.xlu0 %v482, 65
    %v594 = vpop.permute.xlu0 %593
    %595 = vrot.lane.b32.xlu0 %v483, 65
    %v596 = vpop.permute.xlu0 %595
    %597 = vrot.lane.b32.xlu0 %v484, 65
    %v598 = vpop.permute.xlu0 %597
    %599 = vrot.lane.b32.xlu0 %v485, 65
    %v600 = vpop.permute.xlu0 %599
    %605 = vrot.lane.b32.xlu0 %v482, 1
    %v606 = vpop.permute.xlu0 %605
    %607 = vrot.lane.b32.xlu0 %v483, 1
    %v608 = vpop.permute.xlu0 %607
    %609 = vrot.lane.b32.xlu0 %v484, 1
    %v610 = vpop.permute.xlu0 %609
    %611 = vrot.lane.b32.xlu0 %v485, 1
    %v612 = vpop.permute.xlu0 %611
    %vm617 = vcmask 7168
    %v618 = vsel %vm617, %v594, %v606
    %v619 = vsel %vm617, %v596, %v608
    %v620 = vsel %vm617, %v598, %v610
    %v621 = vsel %vm617, %v600, %v612
    %v622 = vlaneseq
    %v623 = vshrl.u32 %v622, 7
    %v624 = vsub.s32 0, %v623
    %v625 = vrot.slane %v592, %v624
    %v626 = vmul.f32 %v618, %v625
    %v627 = vmul.f32 %v619, %v625
    %v628 = vmul.f32 %v620, %v625
    %v629 = vmul.f32 %v621, %v625
    %v630 = vadd.f32 %v588, %v626
    %v631 = vadd.f32 %v589, %v627
    %v632 = vadd.f32 %v590, %v628
    %v633 = vadd.f32 %v591, %v629
    %v634 = vld [vmem:[%s1 + $0x10] sm:$0x1]
    %635 = vrot.lane.b32.xlu0 %v482, 127
    %v636 = vpop.permute.xlu0 %635
    %637 = vrot.lane.b32.xlu0 %v483, 127
    %v638 = vpop.permute.xlu0 %637
    %639 = vrot.lane.b32.xlu0 %v484, 127
    %v640 = vpop.permute.xlu0 %639
    %641 = vrot.lane.b32.xlu0 %v485, 127
    %v642 = vpop.permute.xlu0 %641
    %647 = vrot.lane.b32.xlu0 %v482, 63
    %v648 = vpop.permute.xlu0 %647
    %649 = vrot.lane.b32.xlu0 %v483, 63
    %v650 = vpop.permute.xlu0 %649
    %651 = vrot.lane.b32.xlu0 %v484, 63
    %v652 = vpop.permute.xlu0 %651
    %653 = vrot.lane.b32.xlu0 %v485, 63
    %v654 = vpop.permute.xlu0 %653
    %vm659 = vcmask 515072
    %v660 = vsel %vm659, %v636, %v648
    %v661 = vsel %vm659, %v638, %v650
    %v662 = vsel %vm659, %v640, %v652
    %v663 = vsel %vm659, %v642, %v654
    %v664 = vlaneseq
    %v665 = vshrl.u32 %v664, 7
    %v666 = vsub.s32 0, %v665
    %v667 = vrot.slane %v634, %v666
    %v668 = vmul.f32 %v660, %v667
    %v669 = vmul.f32 %v661, %v667
    %v670 = vmul.f32 %v662, %v667
    %v671 = vmul.f32 %v663, %v667
    %v672 = vadd.f32 %v630, %v668
    %v673 = vadd.f32 %v631, %v669
    %v674 = vadd.f32 %v632, %v670
    %v675 = vadd.f32 %v633, %v671
    %v676 = vld [vmem:[%s1 + $0x11] sm:$0x1]
    %677 = vrot.lane.b32.xlu0 %v482, 126
    %v678 = vpop.permute.xlu0 %677
    %679 = vrot.lane.b32.xlu0 %v483, 126
    %v680 = vpop.permute.xlu0 %679
    %681 = vrot.lane.b32.xlu0 %v484, 126
    %v682 = vpop.permute.xlu0 %681
    %683 = vrot.lane.b32.xlu0 %v485, 126
    %v684 = vpop.permute.xlu0 %683
    %689 = vrot.lane.b32.xlu0 %v482, 62
    %v690 = vpop.permute.xlu0 %689
    %691 = vrot.lane.b32.xlu0 %v483, 62
    %v692 = vpop.permute.xlu0 %691
    %693 = vrot.lane.b32.xlu0 %v484, 62
    %v694 = vpop.permute.xlu0 %693
    %695 = vrot.lane.b32.xlu0 %v485, 62
    %v696 = vpop.permute.xlu0 %695
    %vm701 = vcmask 506880
    %v702 = vsel %vm701, %v678, %v690
    %v703 = vsel %vm701, %v680, %v692
    %v704 = vsel %vm701, %v682, %v694
    %v705 = vsel %vm701, %v684, %v696
    %v706 = vlaneseq
    %v707 = vshrl.u32 %v706, 7
    %v708 = vsub.s32 0, %v707
    %v709 = vrot.slane %v676, %v708
    %v710 = vmul.f32 %v702, %v709
    %v711 = vmul.f32 %v703, %v709
    %v712 = vmul.f32 %v704, %v709
    %v713 = vmul.f32 %v705, %v709
    %v714 = vadd.f32 %v672, %v710
    %v715 = vadd.f32 %v673, %v711
    %v716 = vadd.f32 %v674, %v712
    %v717 = vadd.f32 %v675, %v713
    %v718 = vld [vmem:[%s1 + $0x12] sm:$0x1]
    %719 = vrot.lane.b32.xlu0 %v482, 125
    %v720 = vpop.permute.xlu0 %719
    %721 = vrot.lane.b32.xlu0 %v483, 125
    %v722 = vpop.permute.xlu0 %721
    %723 = vrot.lane.b32.xlu0 %v484, 125
    %v724 = vpop.permute.xlu0 %723
    %725 = vrot.lane.b32.xlu0 %v485, 125
    %v726 = vpop.permute.xlu0 %725
    %731 = vrot.lane.b32.xlu0 %v482, 61
    %v732 = vpop.permute.xlu0 %731
    %733 = vrot.lane.b32.xlu0 %v483, 61
    %v734 = vpop.permute.xlu0 %733
    %735 = vrot.lane.b32.xlu0 %v484, 61
    %v736 = vpop.permute.xlu0 %735
    %737 = vrot.lane.b32.xlu0 %v485, 61
    %v738 = vpop.permute.xlu0 %737
    %vm743 = vcmask 498688
    %v744 = vsel %vm743, %v720, %v732
    %v745 = vsel %vm743, %v722, %v734
    %v746 = vsel %vm743, %v724, %v736
    %v747 = vsel %vm743, %v726, %v738
    %v748 = vlaneseq
    %v749 = vshrl.u32 %v748, 7
    %v750 = vsub.s32 0, %v749
    %v751 = vrot.slane %v718, %v750
    %v752 = vmul.f32 %v744, %v751
    %v753 = vmul.f32 %v745, %v751
    %v754 = vmul.f32 %v746, %v751
    %v755 = vmul.f32 %v747, %v751
    %v756 = vadd.f32 %v714, %v752
    %v757 = vadd.f32 %v715, %v753
    %v758 = vadd.f32 %v716, %v754
    %v759 = vadd.f32 %v717, %v755
    %v760 = vld [vmem:[%s1 + $0x14] sm:$0x1]
    %v761 = vld [vmem:[%s1 + $0x15] sm:$0x1]
    %v762 = vsel %vm364, %v756, 0.0
    %v763 = vsel %vm364, %v757, 0.0
    %v764 = vadd.f32 %v762, %v763
    %v765 = vrot.slane %v764, 4
    %v766 = vadd.f32 %v764, %v765
    %v767 = vrot.slane %v766, 2
    %v768 = vadd.f32 %v766, %v767
    %v769 = vrot.slane %v768, 1
    %v770 = vadd.f32 %v768, %v769
    %v771 = vsel %vm364, %v758, 0.0
    %v772 = vsel %vm364, %v759, 0.0
    %v773 = vadd.f32 %v771, %v772
    %v774 = vrot.slane %v773, 4
    %v775 = vadd.f32 %v773, %v774
    %v776 = vrot.slane %v775, 2
    %v777 = vadd.f32 %v775, %v776
    %v778 = vrot.slane %v777, 1
    %v779 = vadd.f32 %v777, %v778
    %v780 = vmul.f32 %v756, %v756
    %v781 = vmul.f32 %v757, %v757
    %v782 = vmul.f32 %v758, %v758
    %v783 = vmul.f32 %v759, %v759
    %v784 = vsel %vm364, %v780, 0.0
    %v785 = vsel %vm364, %v781, 0.0
    %v786 = vadd.f32 %v784, %v785
    %v787 = vrot.slane %v786, 4
    %v788 = vadd.f32 %v786, %v787
    %v789 = vrot.slane %v788, 2
    %v790 = vadd.f32 %v788, %v789
    %v791 = vrot.slane %v790, 1
    %v792 = vadd.f32 %v790, %v791
    %v793 = vsel %vm364, %v782, 0.0
    %v794 = vsel %vm364, %v783, 0.0
    %v795 = vadd.f32 %v793, %v794
    %v796 = vrot.slane %v795, 4
    %v797 = vadd.f32 %v795, %v796
    %v798 = vrot.slane %v797, 2
    %v799 = vadd.f32 %v797, %v798
    %v800 = vrot.slane %v799, 1
    %v801 = vadd.f32 %v799, %v800
    %v802 = vsel %vm405, %v770, %v792
    %v803 = vsel %vm405, %v779, %v801
    %v804 = vadd.f32 %v802, %v803
    %806 = vrot.lane.b32.xlu0 %v804, 96
    %v807 = vpop.permute.xlu0 %806
    %809 = vrot.lane.b32.xlu0 %v804, 32
    %v810 = vpop.permute.xlu0 %809
    %v812 = vsel %vm416, %v807, %v810
    %v813 = vadd.f32 %v804, %v812
    %815 = vrot.lane.b32.xlu0 %v813, 80
    %v816 = vpop.permute.xlu0 %815
    %818 = vrot.lane.b32.xlu0 %v813, 16
    %v819 = vpop.permute.xlu0 %818
    %v821 = vsel %vm426, %v816, %v819
    %v822 = vadd.f32 %v813, %v821
    %824 = vrot.lane.b32.xlu0 %v822, 72
    %v825 = vpop.permute.xlu0 %824
    %827 = vrot.lane.b32.xlu0 %v822, 8
    %v828 = vpop.permute.xlu0 %827
    %v830 = vsel %vm436, %v825, %v828
    %v831 = vadd.f32 %v822, %v830
    %833 = vrot.lane.b32.xlu0 %v831, 68
    %v834 = vpop.permute.xlu0 %833
    %836 = vrot.lane.b32.xlu0 %v831, 4
    %v837 = vpop.permute.xlu0 %836
    %v839 = vsel %vm446, %v834, %v837
    %v840 = vadd.f32 %v831, %v839
    %v841 = vmul.f32 %v840, 0.001953125
    %v842 = vmul.f32 %v841, %v841
    %v844 = vrot.slane %v842, 7
    %v846 = vsub.f32 %v841, %v844
    %v847 = vadd.f32 %v846, 1e-05
    %v848 = vrsqrt.pop %v847
    %v850 = vrot.slane %v760, 7
    %v852 = vmul.f32 %v848, %v850
    %v854 = vrot.slane %v852, 1
    %v856 = vmul.f32 %v841, %v854
    %v857 = vsub.f32 %v761, %v856
    %v858 = vlaneseq
    %v859 = vshrl.u32 %v858, 7
    %v860 = vsub.s32 1, %v859
    %v861 = vrot.slane %v852, %v860
    %v862 = vmul.f32 %v756, %v861
    %v863 = vmul.f32 %v757, %v861
    %v864 = vmul.f32 %v758, %v861
    %v865 = vmul.f32 %v759, %v861
    %v866 = vlaneseq
    %v867 = vshrl.u32 %v866, 7
    %v868 = vsub.s32 0, %v867
    %v869 = vrot.slane %v857, %v868
    %v870 = vadd.f32 %v862, %v869
    %v871 = vadd.f32 %v863, %v869
    %v872 = vadd.f32 %v864, %v869
    %v873 = vadd.f32 %v865, %v869
    %v874 = vmax.f32 %v870, 0.0
    %v875 = vmax.f32 %v871, 0.0
    %v876 = vmax.f32 %v872, 0.0
    %v877 = vmax.f32 %v873, 0.0
    %878 = vst.msk [vmem:[#allocation2] sm:$0xff] %vm364, %v874
    %879 = vst.msk [vmem:[#allocation2 + $0x8] sm:$0xff] %vm364, %v875
    %880 = vst.msk [vmem:[#allocation2 + $0x10] sm:$0xff] %vm364, %v876
    %881 = vst.msk [vmem:[#allocation2 + $0x18] sm:$0xff] %vm364, %v877
    // Predicated region
    $region10: #{tpu_custom_call.1} parent=1 // pred_check
      _
    $region11: #{tpu_custom_call.1} parent=1 // pred_check_branch
      %883 = sbr.rel (0) target = $region13
    $region12: #{tpu_custom_call.1} parent=1 // pred_region
      %s885 = ssub.s32 512, 512
      %886 = vsyncadd [#allocation3], %s885
      %s887 = sshll.u32 [#allocation2], 4
      %s888 = int_to_ptr.vmem [resolvable:$true] %s887
      %893 = dma.vmem_to_hbm [thread:$0]  %s888, 512, %s2, [#allocation3], 128, 128, 8
    $region13: #{tpu_custom_call.1} parent=1 // pred_fallthru
      _
    // Predicated region
    $region14: #{tpu_custom_call.1} parent=1 // pred_check
      _
    $region15: #{tpu_custom_call.1} parent=1 // pred_check_branch
      %895 = sbr.rel (0) target = $region17
    $region16: #{tpu_custom_call.1} parent=1 // pred_region
      %896 = dma.done [#allocation3], 512
    $region17: #{tpu_custom_call.1} parent=1 // pred_fallthru
      _
    %897 = vsyncpa [#allocation3], 1

</llo_original>
